<compile_context>
chip_gen: v5e
topology: v5e:2x2
jax: 0.10.0
libtpu: 0.0.40
codegen_flags: <defaults>
</compile_context>

<pallas_src>
import jax
import jax.numpy as jnp
from jax.experimental import pallas as pl
from jax.experimental.pallas import tpu as pltpu


# Flat parameter layout (f32[17]):
#   [0:2]   w1 (in=1, out=2)           -> w1[0,j] = p[j]
#   [2:4]   b1 (2,)
#   [4:10]  w2 (in=2, out=3) row-major -> w2[i,j] = p[4 + 3*i + j]
#   [10:13] b2 (3,)
#   [13:16] w3 (in=3, out=1)           -> w3[i,0] = p[13 + i]
#   [16]    b3 (1,)
def mlp_kernel(p_ref, x_ref, o_ref):
    x = x_ref[...]  # (1, B) f32, batch lane-dense

    # fc1 + relu: in=1, out=2  (scalar * vector FMAs on the VPU)
    h1_0 = jnp.maximum(x * p_ref[0] + p_ref[2], 0.0)
    h1_1 = jnp.maximum(x * p_ref[1] + p_ref[3], 0.0)

    # fc2 + relu: in=2, out=3
    h2_0 = jnp.maximum(h1_0 * p_ref[4] + h1_1 * p_ref[7] + p_ref[10], 0.0)
    h2_1 = jnp.maximum(h1_0 * p_ref[5] + h1_1 * p_ref[8] + p_ref[11], 0.0)
    h2_2 = jnp.maximum(h1_0 * p_ref[6] + h1_1 * p_ref[9] + p_ref[12], 0.0)

    # fc3: in=3, out=1
    y = h2_0 * p_ref[13] + h2_1 * p_ref[14] + h2_2 * p_ref[15] + p_ref[16]
    o_ref[...] = y.astype(o_ref.dtype)


def pack_params(w1, b1, w2, b2, w3, b3):
    """Pack (in,out)-layout weights/biases into one flat f32[17] array."""
    return jnp.concatenate([
        w1.reshape(-1),   # 2
        b1.reshape(-1),   # 2
        w2.reshape(-1),   # 6 (row-major over (in=2, out=3))
        b2.reshape(-1),   # 3
        w3.reshape(-1),   # 3
        b3.reshape(-1),   # 1
    ]).astype(jnp.float32)


def mlp_forward(x, params_flat):
    """x: (B, 1) f32 -> (B, 1) f32."""
    B = x.shape[0]
    x_lane = x.reshape(1, B)  # lane-dense: batch on the lane axis
    out = pl.pallas_call(
        mlp_kernel,
        out_shape=jax.ShapeDtypeStruct((1, B), jnp.float32),
        in_specs=[
            pl.BlockSpec(memory_space=pltpu.MemorySpace.SMEM),  # flat params
            pl.BlockSpec(memory_space=pltpu.MemorySpace.VMEM),  # x (1, B)
        ],
        out_specs=pl.BlockSpec(memory_space=pltpu.MemorySpace.VMEM),
    )(params_flat, x_lane)
    return out.reshape(B, 1)


def init_params(key):
    # Deterministic init matching nn.Linear(1,2), (2,3), (3,1).
    # Weights stored as (in, out) = transpose of PyTorch's (out, in) layout.
    ks = jax.random.split(key, 6)
    w1 = jax.random.uniform(ks[0], (1, 2), jnp.float32, -1.0, 1.0)
    b1 = jax.random.uniform(ks[1], (1, 2), jnp.float32, -1.0, 1.0)
    w2 = jax.random.uniform(ks[2], (2, 3), jnp.float32, -0.7, 0.7)
    b2 = jax.random.uniform(ks[3], (1, 3), jnp.float32, -0.7, 0.7)
    w3 = jax.random.uniform(ks[4], (3, 1), jnp.float32, -0.5, 0.5)
    b3 = jax.random.uniform(ks[5], (1, 1), jnp.float32, -0.5, 0.5)
    return w1, b1, w2, b2, w3, b3


def reference_forward(x, w1, b1, w2, b2, w3, b3):
    h1 = jnp.maximum(x @ w1 + b1, 0.0)
    h2 = jnp.maximum(h1 @ w2 + b2, 0.0)
    return h2 @ w3 + b3


if __name__ == "__main__":
    key = jax.random.PRNGKey(0)
    k_x, k_p = jax.random.split(key)
    B = 8
    x = jax.random.normal(k_x, (B, 1), jnp.float32)
    params = init_params(k_p)
    params_flat = pack_params(*params)

    out = mlp_forward(x, params_flat)
    out = jax.block_until_ready(out)

    ref = reference_forward(x, *params)
    assert out.shape == (B, 1), out.shape
    assert jnp.allclose(out, ref, atol=1e-5, rtol=1e-5), (out, ref)
    print("KERNEL_OK")
</pallas_src>

<mosaic_0001>
module attributes {stable_mosaic.version = 11 : i64} {
  func.func @mlp_kernel(%arg0: memref<17xf32, #tpu.memory_space<smem>>, %arg1: memref<1x8xf32, #tpu.memory_space<vmem>>, %arg2: memref<1x8xf32, #tpu.memory_space<vmem>>) attributes {dimension_semantics = [], scalar_prefetch = 0 : i64, scratch_operands = 0 : i64, tpu.core_type = #tpu.core_type<tc>} {
    %c0 = arith.constant 0 : index
    %c0_0 = arith.constant 0 : index
    %0 = vector.load %arg1[%c0, %c0_0] : memref<1x8xf32, #tpu.memory_space<vmem>>, vector<1x8xf32>
    %c0_1 = arith.constant 0 : index
    %1 = memref.load %arg0[%c0_1] : memref<17xf32, #tpu.memory_space<smem>>
    %2 = vector.broadcast %1 : f32 to vector<1x8xf32>
    %3 = arith.mulf %0, %2 : vector<1x8xf32>
    %c2 = arith.constant 2 : index
    %4 = memref.load %arg0[%c2] : memref<17xf32, #tpu.memory_space<smem>>
    %5 = vector.broadcast %4 : f32 to vector<1x8xf32>
    %6 = arith.addf %3, %5 : vector<1x8xf32>
    %cst = arith.constant 0.000000e+00 : f32
    %7 = vector.broadcast %cst : f32 to vector<1x8xf32>
    %8 = arith.maximumf %6, %7 : vector<1x8xf32>
    %c1 = arith.constant 1 : index
    %9 = memref.load %arg0[%c1] : memref<17xf32, #tpu.memory_space<smem>>
    %10 = vector.broadcast %9 : f32 to vector<1x8xf32>
    %11 = arith.mulf %0, %10 : vector<1x8xf32>
    %c3 = arith.constant 3 : index
    %12 = memref.load %arg0[%c3] : memref<17xf32, #tpu.memory_space<smem>>
    %13 = vector.broadcast %12 : f32 to vector<1x8xf32>
    %14 = arith.addf %11, %13 : vector<1x8xf32>
    %cst_2 = arith.constant 0.000000e+00 : f32
    %15 = vector.broadcast %cst_2 : f32 to vector<1x8xf32>
    %16 = arith.maximumf %14, %15 : vector<1x8xf32>
    %c4 = arith.constant 4 : index
    %17 = memref.load %arg0[%c4] : memref<17xf32, #tpu.memory_space<smem>>
    %18 = vector.broadcast %17 : f32 to vector<1x8xf32>
    %19 = arith.mulf %8, %18 : vector<1x8xf32>
    %c7 = arith.constant 7 : index
    %20 = memref.load %arg0[%c7] : memref<17xf32, #tpu.memory_space<smem>>
    %21 = vector.broadcast %20 : f32 to vector<1x8xf32>
    %22 = arith.mulf %16, %21 : vector<1x8xf32>
    %23 = arith.addf %19, %22 : vector<1x8xf32>
    %c10 = arith.constant 10 : index
    %24 = memref.load %arg0[%c10] : memref<17xf32, #tpu.memory_space<smem>>
    %25 = vector.broadcast %24 : f32 to vector<1x8xf32>
    %26 = arith.addf %23, %25 : vector<1x8xf32>
    %cst_3 = arith.constant 0.000000e+00 : f32
    %27 = vector.broadcast %cst_3 : f32 to vector<1x8xf32>
    %28 = arith.maximumf %26, %27 : vector<1x8xf32>
    %c5 = arith.constant 5 : index
    %29 = memref.load %arg0[%c5] : memref<17xf32, #tpu.memory_space<smem>>
    %30 = vector.broadcast %29 : f32 to vector<1x8xf32>
    %31 = arith.mulf %8, %30 : vector<1x8xf32>
    %c8 = arith.constant 8 : index
    %32 = memref.load %arg0[%c8] : memref<17xf32, #tpu.memory_space<smem>>
    %33 = vector.broadcast %32 : f32 to vector<1x8xf32>
    %34 = arith.mulf %16, %33 : vector<1x8xf32>
    %35 = arith.addf %31, %34 : vector<1x8xf32>
    %c11 = arith.constant 11 : index
    %36 = memref.load %arg0[%c11] : memref<17xf32, #tpu.memory_space<smem>>
    %37 = vector.broadcast %36 : f32 to vector<1x8xf32>
    %38 = arith.addf %35, %37 : vector<1x8xf32>
    %cst_4 = arith.constant 0.000000e+00 : f32
    %39 = vector.broadcast %cst_4 : f32 to vector<1x8xf32>
    %40 = arith.maximumf %38, %39 : vector<1x8xf32>
    %c6 = arith.constant 6 : index
    %41 = memref.load %arg0[%c6] : memref<17xf32, #tpu.memory_space<smem>>
    %42 = vector.broadcast %41 : f32 to vector<1x8xf32>
    %43 = arith.mulf %8, %42 : vector<1x8xf32>
    %c9 = arith.constant 9 : index
    %44 = memref.load %arg0[%c9] : memref<17xf32, #tpu.memory_space<smem>>
    %45 = vector.broadcast %44 : f32 to vector<1x8xf32>
    %46 = arith.mulf %16, %45 : vector<1x8xf32>
    %47 = arith.addf %43, %46 : vector<1x8xf32>
    %c12 = arith.constant 12 : index
    %48 = memref.load %arg0[%c12] : memref<17xf32, #tpu.memory_space<smem>>
    %49 = vector.broadcast %48 : f32 to vector<1x8xf32>
    %50 = arith.addf %47, %49 : vector<1x8xf32>
    %cst_5 = arith.constant 0.000000e+00 : f32
    %51 = vector.broadcast %cst_5 : f32 to vector<1x8xf32>
    %52 = arith.maximumf %50, %51 : vector<1x8xf32>
    %c13 = arith.constant 13 : index
    %53 = memref.load %arg0[%c13] : memref<17xf32, #tpu.memory_space<smem>>
    %54 = vector.broadcast %53 : f32 to vector<1x8xf32>
    %55 = arith.mulf %28, %54 : vector<1x8xf32>
    %c14 = arith.constant 14 : index
    %56 = memref.load %arg0[%c14] : memref<17xf32, #tpu.memory_space<smem>>
    %57 = vector.broadcast %56 : f32 to vector<1x8xf32>
    %58 = arith.mulf %40, %57 : vector<1x8xf32>
    %59 = arith.addf %55, %58 : vector<1x8xf32>
    %c15 = arith.constant 15 : index
    %60 = memref.load %arg0[%c15] : memref<17xf32, #tpu.memory_space<smem>>
    %61 = vector.broadcast %60 : f32 to vector<1x8xf32>
    %62 = arith.mulf %52, %61 : vector<1x8xf32>
    %63 = arith.addf %59, %62 : vector<1x8xf32>
    %c16 = arith.constant 16 : index
    %64 = memref.load %arg0[%c16] : memref<17xf32, #tpu.memory_space<smem>>
    %65 = vector.broadcast %64 : f32 to vector<1x8xf32>
    %66 = arith.addf %63, %65 : vector<1x8xf32>
    %c0_6 = arith.constant 0 : index
    %c0_7 = arith.constant 0 : index
    %67 = vector.load %arg2[%c0_6, %c0_7] : memref<1x8xf32, #tpu.memory_space<vmem>>, vector<1x8xf32>
    tpu.vector_store %arg2[%c0_6, %c0_7], %66 {strides = array<i32>} : memref<1x8xf32, #tpu.memory_space<vmem>>, vector<1x8xf32>,
    return
  }
}

</mosaic_0001>

<llo_original>
// kernel: tpu_custom_call.1
$region0: #{tpu_custom_call.1}
  #allocation0 [shape = 'u32[]', space=smem, size = 0x4, offset = 0x4, fixed_abs, tag = 'smem constant byte address 0x4 - core index']
  #allocation1 [shape = 'u32[72,128]{1,0:T(1,128)}', space=vmem, size = 0x9000, scoped, tag = 'internal scratch']
  %s0 = inlined_call_operand.hbm [shape: f32[17], index: 0, kind: input, shape index: {}]
  %s1 = inlined_call_operand.hbm [shape: f32[1,8], index: 1, kind: input, shape index: {}]
  %s2 = inlined_call_operand.hbm [shape: f32[1,8], index: 2, kind: output, shape index: {}]
  %s3 = sld [smem:[#allocation0]]
  $region26: #{tpu_custom_call.1} parent=0
    _
  %s5 = ssub.s32 1, %s3
  %s6 = scalar_select 0, %s5, %s3
  $region1: #{tpu_custom_call.1} parent=0
    #allocation2 [shape = 'u8[512]{0}', space=smem, size = 0x200, scoped, tag = 'input window, operand 0, single buffered']
    #allocation3 [shape = 's32[1]{0}', space=sflag, size = 0x4, scoped, tag = 'scoped memory for tpu_custom_call.1']
    #allocation4 [shape = 's32[1]{0}', space=sflag, size = 0x4, scoped, tag = 'scoped memory for tpu_custom_call.1']
    #allocation5 [shape = 's32[1]{0}', space=sflag, size = 0x4, scoped, tag = 'scoped memory for tpu_custom_call.1']
    #allocation6 [shape = 'u8[512]{0}', space=vmem, size = 0x400, scoped, tag = 'input window, operand 1, single buffered']
    #allocation7 [shape = 'u8[512]{0}', space=vmem, size = 0x400, scoped, tag = 'output window, operand 0, single buffered']
    %7 = vsyncpa [#allocation5], 0
    %8 = vsyncpa [#allocation3], 0
    %9 = vsyncpa [#allocation4], 0
    // Predicated region
    $region2: #{tpu_custom_call.1} parent=1 // pred_check
      _
    $region3: #{tpu_custom_call.1} parent=1 // pred_check_branch
      %11 = sbr.rel (0) target = $region5
    $region4: #{tpu_custom_call.1} parent=1 // pred_region
      %13 = vsyncadd [#allocation5], 0
      %s15 = sshll.u32 %s0, 4
      %s16 = int_to_ptr.hbm [resolvable:$true] %s15
      %18 = dma.hbm_to_smem %s16, 16, [#allocation2], [#allocation5]
    $region5: #{tpu_custom_call.1} parent=1 // pred_fallthru
      _
    // Predicated region
    $region6: #{tpu_custom_call.1} parent=1 // pred_check
      _
    $region7: #{tpu_custom_call.1} parent=1 // pred_check_branch
      %20 = sbr.rel (0) target = $region9
    $region8: #{tpu_custom_call.1} parent=1 // pred_region
      %22 = vsyncadd [#allocation3], 0
      %s24 = sshll.u32 %s1, 4
      %s25 = int_to_ptr.hbm [resolvable:$true] %s24
      %s26 = sshll.u32 [#allocation6], 4
      %s27 = int_to_ptr.vmem [resolvable:$true] %s26
      %29 = dma.hbm_to_vmem [thread:$0]  %s25, 16, %s27, [#allocation3]
    $region9: #{tpu_custom_call.1} parent=1 // pred_fallthru
      _
    // Predicated region
    $region10: #{tpu_custom_call.1} parent=1 // pred_check
      _
    $region11: #{tpu_custom_call.1} parent=1 // pred_check_branch
      %31 = sbr.rel (0) target = $region13
    $region12: #{tpu_custom_call.1} parent=1 // pred_region
      %33 = dma.done [#allocation5], 16
    $region13: #{tpu_custom_call.1} parent=1 // pred_fallthru
      _
    // Predicated region
    $region14: #{tpu_custom_call.1} parent=1 // pred_check
      _
    $region15: #{tpu_custom_call.1} parent=1 // pred_check_branch
      %35 = sbr.rel (0) target = $region17
    $region16: #{tpu_custom_call.1} parent=1 // pred_region
      %37 = dma.done [#allocation3], 16
    $region17: #{tpu_custom_call.1} parent=1 // pred_fallthru
      _
    %38 = sfence
    %v39 = vld [vmem:[#allocation6] sm:$0x1]
    %s40 = sld [smem:[#allocation2]]
    %v41 = vstv %s40
    %v42 = vmul.f32 %v39, %v41
    %s43 = sld [smem:[#allocation2 + $0x2]]
    %v44 = vstv %s43
    %v45 = vadd.f32 %v42, %v44
    %v46 = vmax.f32 %v45, 0.0
    %s47 = sld [smem:[#allocation2 + $0x1]]
    %v48 = vstv %s47
    %v49 = vmul.f32 %v39, %v48
    %s50 = sld [smem:[#allocation2 + $0x3]]
    %v51 = vstv %s50
    %v52 = vadd.f32 %v49, %v51
    %v53 = vmax.f32 %v52, 0.0
    %s54 = sld [smem:[#allocation2 + $0x4]]
    %v55 = vstv %s54
    %v56 = vmul.f32 %v46, %v55
    %s57 = sld [smem:[#allocation2 + $0x7]]
    %v58 = vstv %s57
    %v59 = vmul.f32 %v53, %v58
    %v60 = vadd.f32 %v56, %v59
    %s61 = sld [smem:[#allocation2 + $0xa]]
    %v62 = vstv %s61
    %v63 = vadd.f32 %v60, %v62
    %v64 = vmax.f32 %v63, 0.0
    %s65 = sld [smem:[#allocation2 + $0x5]]
    %v66 = vstv %s65
    %v67 = vmul.f32 %v46, %v66
    %s68 = sld [smem:[#allocation2 + $0x8]]
    %v69 = vstv %s68
    %v70 = vmul.f32 %v53, %v69
    %v71 = vadd.f32 %v67, %v70
    %s72 = sld [smem:[#allocation2 + $0xb]]
    %v73 = vstv %s72
    %v74 = vadd.f32 %v71, %v73
    %v75 = vmax.f32 %v74, 0.0
    %s76 = sld [smem:[#allocation2 + $0x6]]
    %v77 = vstv %s76
    %v78 = vmul.f32 %v46, %v77
    %s79 = sld [smem:[#allocation2 + $0x9]]
    %v80 = vstv %s79
    %v81 = vmul.f32 %v53, %v80
    %v82 = vadd.f32 %v78, %v81
    %s83 = sld [smem:[#allocation2 + $0xc]]
    %v84 = vstv %s83
    %v85 = vadd.f32 %v82, %v84
    %v86 = vmax.f32 %v85, 0.0
    %s87 = sld [smem:[#allocation2 + $0xd]]
    %v88 = vstv %s87
    %v89 = vmul.f32 %v64, %v88
    %s90 = sld [smem:[#allocation2 + $0xe]]
    %v91 = vstv %s90
    %v92 = vmul.f32 %v75, %v91
    %v93 = vadd.f32 %v89, %v92
    %s94 = sld [smem:[#allocation2 + $0xf]]
    %v95 = vstv %s94
    %v96 = vmul.f32 %v86, %v95
    %v97 = vadd.f32 %v93, %v96
    %s98 = sld [smem:[#allocation2 + $0x10]]
    %v99 = vstv %s98
    %v100 = vadd.f32 %v97, %v99
    %vm101 = vcmask 57344
    %102 = vst.msk [vmem:[#allocation7] sm:$0x1] %vm101, %v100
    // Predicated region
    $region18: #{tpu_custom_call.1} parent=1 // pred_check
      _
    $region19: #{tpu_custom_call.1} parent=1 // pred_check_branch
      %104 = sbr.rel (0) target = $region21
    $region20: #{tpu_custom_call.1} parent=1 // pred_region
      %106 = vsyncadd [#allocation4], 0
      %s108 = sshll.u32 [#allocation7], 4
      %s109 = int_to_ptr.vmem [resolvable:$true] %s108
      %s110 = sshll.u32 %s2, 4
      %s111 = int_to_ptr.hbm [resolvable:$true] %s110
      %113 = dma.vmem_to_hbm [thread:$0]  %s109, 16, %s111, [#allocation4]
    $region21: #{tpu_custom_call.1} parent=1 // pred_fallthru
      _
    // Predicated region
    $region22: #{tpu_custom_call.1} parent=1 // pred_check
      _
    $region23: #{tpu_custom_call.1} parent=1 // pred_check_branch
      %115 = sbr.rel (0) target = $region25
    $region24: #{tpu_custom_call.1} parent=1 // pred_region
      %117 = dma.done [#allocation4], 16
    $region25: #{tpu_custom_call.1} parent=1 // pred_fallthru
      _
    %118 = vsyncpa [#allocation3], 1
    %119 = vsyncpa [#allocation4], 1
    %120 = vsyncpa [#allocation5], 1

</llo_original>
